<compile_context>
chip_gen: v6e
topology: v6e:2x2x1
jax: 0.10.0
libtpu: 0.0.40
codegen_flags: <defaults>
</compile_context>

<pallas_src>
import jax
import jax.numpy as jnp
from jax.experimental import pallas as pl
from jax.experimental.pallas import tpu as pltpu

_SQRT2 = 1.4142135623730951
_NEG_INF = -1e30


def _round_up(x, m):
    return ((x + m - 1) // m) * m


def _make_classifier_kernel(num_layers):
    """Kernel for `num_layers` Linear layers (GELU between, softmax after)."""

    def kernel(*refs):
        x_ref = refs[0]
        out_ref = refs[-1]
        wb = refs[1:-1]  # interleaved (W0, b0, W1, b1, ...)

        # f32 activation tile -> bf16 in-kernel (saves a wrapper pad/cast HBM pass).
        h = x_ref[...].astype(jnp.bfloat16)
        acc = None
        for i in range(num_layers):
            w = wb[2 * i][...]          # bf16 [in, out_pad] (VMEM-resident, Buffered(1))
            b = wb[2 * i + 1][...]      # f32  [1, out_pad]
            # bf16 x bf16 -> f32 accumulate on the MXU.
            acc = jnp.dot(h, w, preferred_element_type=jnp.float32) + b
            if i < num_layers - 1:
                # Exact (erf) GELU in f32 (matches torch.nn.GELU default).
                acc = 0.5 * acc * (1.0 + jax.lax.erf(acc * (1.0 / _SQRT2)))
                h = acc.astype(jnp.bfloat16)

        # Padded class columns carry a -1e30 bias (folded in prepare_params), so
        # exp underflows to exactly 0 there -> no iota/where mask needed here.
        m = jnp.max(acc, axis=-1, keepdims=True)
        e = jnp.exp(acc - m)
        denom = jnp.sum(e, axis=-1, keepdims=True)
        # EUP reciprocal keeps the divide off the (erf-busy) VALU.
        out_ref[...] = (e * pl.reciprocal(denom, approx=True)).astype(out_ref.dtype)

    return kernel


def prepare_params(params):
    """Pad/cast weights once (lane-dense bf16) so repeated forwards don't redo it.

    params : list of (W, b) with W: [in, out] f32, b: [1, out] f32
    returns: list of (W_pad bf16 [in_pad, out_pad], b_pad f32 [1, out_pad]).
    The final layer's padded bias columns are set to -1e30 (class mask folded in).
    """
    num_layers = len(params)
    prepared = []
    prev_pad = params[0][0].shape[0]  # first in-dim stays unpadded (matches raw x)
    for li, (w, b) in enumerate(params):
        din, dout = w.shape
        dout_pad = _round_up(dout, 128)
        wp = jnp.pad(w, ((0, prev_pad - din), (0, dout_pad - dout))).astype(jnp.bfloat16)
        bp = jnp.pad(b.astype(jnp.float32), ((0, 0), (0, dout_pad - dout)))
        if li == num_layers - 1 and dout_pad > dout:
            col = jnp.arange(dout_pad)[None, :]
            bp = jnp.where(col < dout, bp, jnp.float32(_NEG_INF))
        prepared.append((wp, bp))
        prev_pad = dout_pad
    return prepared


def base_classifier_forward(x, prepared, num_classes, *, max_tile_b=512,
                            vmem_cap_bytes=None):
    """Fused BaseClassifier forward.

    x        : [B, input_size] float32
    prepared : output of prepare_params (padded bf16 weights, f32 biases)
    returns  : [B, num_classes] float32 softmax probabilities
    """
    num_layers = len(prepared)
    B, F = x.shape
    assert prepared[0][0].shape[0] == F, "x feature dim must match first layer"
    c_pad = prepared[-1][0].shape[1]

    # Per-TC VMEM budget (chip-aware when queryable; conservative v7x fallback).
    if vmem_cap_bytes is None:
        try:
            phys = int(pltpu.get_tpu_info().vmem_capacity_bytes)
        except Exception:
            phys = 64 * 1024 * 1024
        vmem_cap_bytes = min(max(phys * 3 // 4, 32 * 1024 * 1024), 96 * 1024 * 1024)

    # Resident footprint: weights/biases are single-buffered (constant index_map).
    wb_bytes = sum(int(w.size) * w.dtype.itemsize + int(b.size) * b.dtype.itemsize
                   for (w, b) in prepared)
    widest = max([F, c_pad] + [w.shape[1] for (w, _) in prepared])

    def vmem_estimate(tb):
        x_tiles = 2 * tb * F * 4          # f32 x tiles, double-buffered
        out_tiles = 2 * tb * c_pad * 4    # f32 out tiles, double-buffered
        interm = 3 * tb * widest * 4      # live f32 acc + bf16 copies + slack
        return wb_bytes + x_tiles + out_tiles + interm

    # Largest batch tile that fits the budget (amortizes ~0.35us/step grid overhead
    # and per-tile MXU weight pushes). Multiple of 16 for the bf16 (16,128) tile.
    TB = min(max_tile_b, max(16, _round_up(B, 16)))
    while TB > 16 and vmem_estimate(TB) > vmem_cap_bytes:
        TB -= 16
    # Keep >=2 grid steps when the batch allows it so the "parallel" axis can be
    # sharded across v7x's two TensorCores.
    if B > 32 and _round_up(B, TB) // TB < 2:
        TB = max(16, _round_up(pl.cdiv(B, 2), 16))

    PB = _round_up(B, TB)
    grid = (PB // TB,)

    # Only pad the batch dim (zeros) when it is not a multiple of the tile.
    xp = x if PB == B else jnp.pad(x, ((0, PB - B), (0, 0)))

    flat_args = [xp]
    in_specs = [pl.BlockSpec((TB, F), lambda i: (i, 0))]
    for (wp, bp) in prepared:
        flat_args.append(wp)
        in_specs.append(pl.BlockSpec(wp.shape, lambda i: (0, 0),
                                     pipeline_mode=pl.Buffered(1)))
        flat_args.append(bp)
        in_specs.append(pl.BlockSpec(bp.shape, lambda i: (0, 0),
                                     pipeline_mode=pl.Buffered(1)))

    out_shape = jax.ShapeDtypeStruct((PB, c_pad), jnp.float32)
    out_spec = pl.BlockSpec((TB, c_pad), lambda i: (i, 0))

    dims = [F] + [w.shape[1] for (w, _) in prepared]
    flops = 2 * PB * sum(dims[i] * dims[i + 1] for i in range(num_layers))
    transcendentals = PB * sum(dims[1:])
    bytes_accessed = xp.size * 4 + wb_bytes + PB * c_pad * 4

    fn = pl.pallas_call(
        _make_classifier_kernel(num_layers),
        out_shape=out_shape,
        grid=grid,
        in_specs=in_specs,
        out_specs=out_spec,
        compiler_params=pltpu.CompilerParams(
            dimension_semantics=("parallel",),          # batch tiles are independent
            vmem_limit_bytes=int(vmem_cap_bytes),
        ),
        cost_estimate=pl.CostEstimate(
            flops=int(flops),
            transcendentals=int(transcendentals),
            bytes_accessed=int(bytes_accessed),
        ),
    )
    out_padded = fn(*flat_args)
    return out_padded[:B, :num_classes]


def init_params(key, input_size, hidden_sizes, output_size):
    """Deterministic parameter init mirroring the PyTorch module's layer shapes."""
    dims = [input_size] + list(hidden_sizes) + [output_size]
    params = []
    for i in range(len(dims) - 1):
        fan_in, fan_out = dims[i], dims[i + 1]
        key, kw, kb = jax.random.split(key, 3)
        bound = 1.0 / jnp.sqrt(jnp.float32(fan_in))
        w = jax.random.uniform(kw, (fan_in, fan_out), jnp.float32, -bound, bound)
        b = jax.random.uniform(kb, (1, fan_out), jnp.float32, -bound, bound)
        params.append((w, b))
    return params


def _reference_forward(x, params):
    """Pure-JAX reference mirroring the kernel's bf16-matmul / f32-accumulate math."""
    h = x
    for i, (w, b) in enumerate(params):
        h = jnp.dot(h.astype(jnp.bfloat16), w.astype(jnp.bfloat16),
                    preferred_element_type=jnp.float32) + b
        if i < len(params) - 1:
            h = 0.5 * h * (1.0 + jax.lax.erf(h / _SQRT2))
    return jax.nn.softmax(h, axis=1)


if __name__ == "__main__":
    key = jax.random.PRNGKey(0)

    # --- Test 1: same tiny config as the PyTorch module example (single grid step) ---
    batch, input_size, hidden_sizes, output_size = 8, 32, [64, 32], 16
    key, kx = jax.random.split(key)
    x = jax.random.normal(kx, (batch, input_size), dtype=jnp.float32)
    params = init_params(key, input_size, hidden_sizes, output_size)
    prepared = prepare_params(params)            # pad/cast weights once, reuse per call

    out = jax.block_until_ready(base_classifier_forward(x, prepared, output_size))
    ref = _reference_forward(x, params)
    assert out.shape == (batch, output_size)
    assert jnp.allclose(out, ref, atol=5e-3, rtol=5e-3), "mismatch vs reference (test 1)"
    assert jnp.allclose(jnp.sum(out, axis=1), 1.0, atol=5e-3)

    # --- Test 2: exercises multiple batch tiles (>=2 grid steps) + ragged batch ---
    batch2, input2, hidden2, output2 = 300, 64, [128], 10
    key, kx2 = jax.random.split(key)
    x2 = jax.random.normal(kx2, (batch2, input2), dtype=jnp.float32)
    params2 = init_params(key, input2, hidden2, output2)
    prepared2 = prepare_params(params2)

    out2 = jax.block_until_ready(base_classifier_forward(x2, prepared2, output2))
    ref2 = _reference_forward(x2, params2)
    assert out2.shape == (batch2, output2)
    assert jnp.allclose(out2, ref2, atol=5e-3, rtol=5e-3), "mismatch vs reference (test 2)"
    assert jnp.allclose(jnp.sum(out2, axis=1), 1.0, atol=5e-3)

    print("KERNEL_OK")
</pallas_src>

<mosaic_0001>
module attributes {stable_mosaic.version = 11 : i64} {
  func.func @kernel(%arg0: i32, %arg1: memref<16x32xf32, #tpu.memory_space<vmem>>, %arg2: memref<32x128xbf16, #tpu.memory_space<vmem>>, %arg3: memref<1x128xf32, #tpu.memory_space<vmem>>, %arg4: memref<128x128xbf16, #tpu.memory_space<vmem>>, %arg5: memref<1x128xf32, #tpu.memory_space<vmem>>, %arg6: memref<128x128xbf16, #tpu.memory_space<vmem>>, %arg7: memref<1x128xf32, #tpu.memory_space<vmem>>, %arg8: memref<16x128xf32, #tpu.memory_space<vmem>>) attributes {dimension_semantics = [#tpu.dimension_semantics<parallel>], iteration_bounds = array<i64: 1>, scalar_prefetch = 0 : i64, scratch_operands = 0 : i64, tpu.core_type = #tpu.core_type<tc>, window_params = [{transform_indices = @transform_0, window_bounds = array<i64: 16, 32>}, {pipeline_mode = #tpu.pipeline_mode<synchronous>, transform_indices = @transform_1, window_bounds = array<i64: 32, 128>}, {pipeline_mode = #tpu.pipeline_mode<synchronous>, transform_indices = @transform_2, window_bounds = array<i64: 1, 128>}, {pipeline_mode = #tpu.pipeline_mode<synchronous>, transform_indices = @transform_3, window_bounds = array<i64: 128, 128>}, {pipeline_mode = #tpu.pipeline_mode<synchronous>, transform_indices = @transform_4, window_bounds = array<i64: 1, 128>}, {pipeline_mode = #tpu.pipeline_mode<synchronous>, transform_indices = @transform_5, window_bounds = array<i64: 128, 128>}, {pipeline_mode = #tpu.pipeline_mode<synchronous>, transform_indices = @transform_6, window_bounds = array<i64: 1, 128>}, {transform_indices = @transform_7, window_bounds = array<i64: 16, 128>}]} {
    %c0 = arith.constant 0 : index
    %c0_0 = arith.constant 0 : index
    %0 = vector.load %arg1[%c0, %c0_0] : memref<16x32xf32, #tpu.memory_space<vmem>>, vector<16x32xf32>
    %1 = arith.truncf %0 : vector<16x32xf32> to vector<16x32xbf16>
    %c0_1 = arith.constant 0 : index
    %c0_2 = arith.constant 0 : index
    %2 = vector.load %arg2[%c0_1, %c0_2] : memref<32x128xbf16, #tpu.memory_space<vmem>>, vector<32x128xbf16>
    %c0_3 = arith.constant 0 : index
    %c0_4 = arith.constant 0 : index
    %3 = vector.load %arg3[%c0_3, %c0_4] : memref<1x128xf32, #tpu.memory_space<vmem>>, vector<1x128xf32>
    %cst = arith.constant dense<0.000000e+00> : vector<16x128xf32>
    %4 = tpu.matmul %1, %2, %cst {dimension_numbers = #tpu.dot_dimension_numbers<[1], [0], [0], [1], [0, 0, 1, 1], [], []>} : vector<16x32xbf16>, vector<32x128xbf16>, vector<16x128xf32> -> vector<16x128xf32>
    %5 = vector.broadcast %3 : vector<1x128xf32> to vector<16x128xf32>
    %6 = arith.addf %4, %5 : vector<16x128xf32>
    %cst_5 = arith.constant 5.000000e-01 : f32
    %7 = vector.broadcast %cst_5 : f32 to vector<16x128xf32>
    %8 = arith.mulf %7, %6 : vector<16x128xf32>
    %cst_6 = arith.constant 0.707106769 : f32
    %9 = vector.broadcast %cst_6 : f32 to vector<16x128xf32>
    %10 = arith.mulf %6, %9 : vector<16x128xf32>
    %11 = math.erf %10 : vector<16x128xf32>
    %cst_7 = arith.constant 1.000000e+00 : f32
    %12 = vector.broadcast %cst_7 : f32 to vector<16x128xf32>
    %13 = arith.addf %12, %11 : vector<16x128xf32>
    %14 = arith.mulf %8, %13 : vector<16x128xf32>
    %15 = arith.truncf %14 : vector<16x128xf32> to vector<16x128xbf16>
    %c0_8 = arith.constant 0 : index
    %c0_9 = arith.constant 0 : index
    %16 = vector.load %arg4[%c0_8, %c0_9] : memref<128x128xbf16, #tpu.memory_space<vmem>>, vector<128x128xbf16>
    %c0_10 = arith.constant 0 : index
    %c0_11 = arith.constant 0 : index
    %17 = vector.load %arg5[%c0_10, %c0_11] : memref<1x128xf32, #tpu.memory_space<vmem>>, vector<1x128xf32>
    %cst_12 = arith.constant dense<0.000000e+00> : vector<16x128xf32>
    %18 = tpu.matmul %15, %16, %cst_12 {dimension_numbers = #tpu.dot_dimension_numbers<[1], [0], [0], [1], [0, 0, 1, 1], [], []>} : vector<16x128xbf16>, vector<128x128xbf16>, vector<16x128xf32> -> vector<16x128xf32>
    %19 = vector.broadcast %17 : vector<1x128xf32> to vector<16x128xf32>
    %20 = arith.addf %18, %19 : vector<16x128xf32>
    %cst_13 = arith.constant 5.000000e-01 : f32
    %21 = vector.broadcast %cst_13 : f32 to vector<16x128xf32>
    %22 = arith.mulf %21, %20 : vector<16x128xf32>
    %cst_14 = arith.constant 0.707106769 : f32
    %23 = vector.broadcast %cst_14 : f32 to vector<16x128xf32>
    %24 = arith.mulf %20, %23 : vector<16x128xf32>
    %25 = math.erf %24 : vector<16x128xf32>
    %cst_15 = arith.constant 1.000000e+00 : f32
    %26 = vector.broadcast %cst_15 : f32 to vector<16x128xf32>
    %27 = arith.addf %26, %25 : vector<16x128xf32>
    %28 = arith.mulf %22, %27 : vector<16x128xf32>
    %29 = arith.truncf %28 : vector<16x128xf32> to vector<16x128xbf16>
    %c0_16 = arith.constant 0 : index
    %c0_17 = arith.constant 0 : index
    %30 = vector.load %arg6[%c0_16, %c0_17] : memref<128x128xbf16, #tpu.memory_space<vmem>>, vector<128x128xbf16>
    %c0_18 = arith.constant 0 : index
    %c0_19 = arith.constant 0 : index
    %31 = vector.load %arg7[%c0_18, %c0_19] : memref<1x128xf32, #tpu.memory_space<vmem>>, vector<1x128xf32>
    %cst_20 = arith.constant dense<0.000000e+00> : vector<16x128xf32>
    %32 = tpu.matmul %29, %30, %cst_20 {dimension_numbers = #tpu.dot_dimension_numbers<[1], [0], [0], [1], [0, 0, 1, 1], [], []>} : vector<16x128xbf16>, vector<128x128xbf16>, vector<16x128xf32> -> vector<16x128xf32>
    %33 = vector.broadcast %31 : vector<1x128xf32> to vector<16x128xf32>
    %34 = arith.addf %32, %33 : vector<16x128xf32>
    %cst_21 = arith.constant dense<0xFF800000> : vector<16xf32>
    %35 = vector.multi_reduction <maximumf>, %34, %cst_21 [1] : vector<16x128xf32> to vector<16xf32>
    %36 = vector.shape_cast %35 : vector<16xf32> to vector<16x1xf32>
    %37 = vector.broadcast %36 : vector<16x1xf32> to vector<16x128xf32>
    %38 = arith.subf %34, %37 : vector<16x128xf32>
    %39 = math.exp %38 : vector<16x128xf32>
    %cst_22 = arith.constant dense<0.000000e+00> : vector<16xf32>
    %40 = vector.multi_reduction <add>, %39, %cst_22 [1] : vector<16x128xf32> to vector<16xf32>
    %41 = vector.shape_cast %40 : vector<16xf32> to vector<16x1xf32>
    %42 = tpu.reciprocal %41 {approx = true} : vector<16x1xf32> -> vector<16x1xf32>
    %43 = vector.broadcast %42 : vector<16x1xf32> to vector<16x128xf32>
    %44 = arith.mulf %39, %43 : vector<16x128xf32>
    %c0_23 = arith.constant 0 : index
    %c0_24 = arith.constant 0 : index
    %45 = vector.load %arg8[%c0_23, %c0_24] : memref<16x128xf32, #tpu.memory_space<vmem>>, vector<16x128xf32>
    tpu.vector_store %arg8[%c0_23, %c0_24], %44 {strides = array<i32>} : memref<16x128xf32, #tpu.memory_space<vmem>>, vector<16x128xf32>,
    return
  }
  func.func @transform_0(%arg0: i32) -> (i32, i32) {
    %c0_i32 = arith.constant 0 : i32
    %c0_i32_0 = arith.constant 0 : i32
    return %arg0, %c0_i32 : i32, i32
  }
  func.func @transform_1(%arg0: i32) -> (i32, i32) {
    %c0_i32 = arith.constant 0 : i32
    %c0_i32_0 = arith.constant 0 : i32
    %c0_i32_1 = arith.constant 0 : i32
    return %c0_i32, %c0_i32_0 : i32, i32
  }
  func.func @transform_2(%arg0: i32) -> (i32, i32) {
    %c0_i32 = arith.constant 0 : i32
    %c0_i32_0 = arith.constant 0 : i32
    %c0_i32_1 = arith.constant 0 : i32
    return %c0_i32, %c0_i32_0 : i32, i32
  }
  func.func @transform_3(%arg0: i32) -> (i32, i32) {
    %c0_i32 = arith.constant 0 : i32
    %c0_i32_0 = arith.constant 0 : i32
    %c0_i32_1 = arith.constant 0 : i32
    return %c0_i32, %c0_i32_0 : i32, i32
  }
  func.func @transform_4(%arg0: i32) -> (i32, i32) {
    %c0_i32 = arith.constant 0 : i32
    %c0_i32_0 = arith.constant 0 : i32
    %c0_i32_1 = arith.constant 0 : i32
    return %c0_i32, %c0_i32_0 : i32, i32
  }
  func.func @transform_5(%arg0: i32) -> (i32, i32) {
    %c0_i32 = arith.constant 0 : i32
    %c0_i32_0 = arith.constant 0 : i32
    %c0_i32_1 = arith.constant 0 : i32
    return %c0_i32, %c0_i32_0 : i32, i32
  }
  func.func @transform_6(%arg0: i32) -> (i32, i32) {
    %c0_i32 = arith.constant 0 : i32
    %c0_i32_0 = arith.constant 0 : i32
    %c0_i32_1 = arith.constant 0 : i32
    return %c0_i32, %c0_i32_0 : i32, i32
  }
  func.func @transform_7(%arg0: i32) -> (i32, i32) {
    %c0_i32 = arith.constant 0 : i32
    %c0_i32_0 = arith.constant 0 : i32
    return %arg0, %c0_i32 : i32, i32
  }
}

</mosaic_0001>

<llo_original>
// kernel: tpu_custom_call.1
$region0: #{tpu_custom_call.1}
  #allocation0 [shape = 'u32[]', space=smem, size = 0x4, offset = 0x4, fixed_abs, tag = 'smem constant byte address 0x4 - core index']
  #allocation1 [shape = 'u32[144,128]{1,0:T(1,128)}', space=vmem, size = 0x12000, scoped, tag = 'internal scratch']
  %s0 = inlined_call_operand.hbm [shape: f32[16,32], index: 0, kind: input, shape index: {}]
  %s1 = inlined_call_operand.hbm [shape: bf16[32,128], index: 1, kind: input, shape index: {}]
  %s2 = inlined_call_operand.vmem [shape: f32[1,128], index: 2, kind: input, shape index: {}]
  %s3 = inlined_call_operand.hbm [shape: bf16[128,128], index: 3, kind: input, shape index: {}]
  %s4 = inlined_call_operand.vmem [shape: f32[1,128], index: 4, kind: input, shape index: {}]
  %s5 = inlined_call_operand.hbm [shape: bf16[128,128], index: 5, kind: input, shape index: {}]
  %s6 = inlined_call_operand.vmem [shape: f32[1,128], index: 6, kind: input, shape index: {}]
  %s7 = inlined_call_operand.hbm [shape: f32[16,128], index: 7, kind: output, shape index: {}]
  %s8 = sld [smem:[#allocation0]]
  $region54: #{tpu_custom_call.1} parent=0
    _
  %s10 = ssub.s32 1, %s8
  %s11 = scalar_select 0, %s10, %s8
  $region1: #{tpu_custom_call.1} parent=0
    #allocation2 [shape = 'u8[8192]{0}', space=vmem, size = 0x2000, scoped, tag = 'input window, operand 0, single buffered']
    #allocation3 [shape = 's32[1]{0}', space=sflag, size = 0x4, scoped, tag = 'scoped memory for tpu_custom_call.1']
    #allocation4 [shape = 's32[1]{0}', space=sflag, size = 0x4, scoped, tag = 'scoped memory for tpu_custom_call.1']
    #allocation5 [shape = 'u8[8192]{0}', space=vmem, size = 0x2000, scoped, tag = 'input window, operand 1, single buffered']
    #allocation6 [shape = 's32[1]{0}', space=sflag, size = 0x4, scoped, tag = 'scoped memory for tpu_custom_call.1']
    #allocation7 [shape = 'u8[32768]{0}', space=vmem, size = 0x8000, scoped, tag = 'input window, operand 3, single buffered']
    #allocation8 [shape = 'u8[32768]{0}', space=vmem, size = 0x8000, scoped, tag = 'input window, operand 5, single buffered']
    #allocation9 [shape = 's32[1]{0}', space=sflag, size = 0x4, scoped, tag = 'scoped memory for tpu_custom_call.1']
    #allocation10 [shape = 'u8[8192]{0}', space=vmem, size = 0x2000, scoped, tag = 'output window, operand 0, single buffered']
    %12 = vsyncpa [#allocation3], 0
    %13 = vsyncpa [#allocation6], 0
    %14 = vsyncpa [#allocation9], 0
    %15 = vsyncpa [#allocation4], 0
    // Predicated region
    $region2: #{tpu_custom_call.1} parent=1 // pred_check
      _
    $region3: #{tpu_custom_call.1} parent=1 // pred_check_branch
      %17 = sbr.rel (0) target = $region5
    $region4: #{tpu_custom_call.1} parent=1 // pred_region
      %s19 = ssub.s32 256, 256
      %20 = vsyncadd [#allocation3], %s19
      %s21 = sshll.u32 [#allocation2], 4
      %s22 = int_to_ptr.vmem [resolvable:$true] %s21
      %27 = dma.hbm_to_vmem [thread:$0]  %s0, 256, %s22, [#allocation3], 128, 128, 8
    $region5: #{tpu_custom_call.1} parent=1 // pred_fallthru
      _
    // Predicated region
    $region6: #{tpu_custom_call.1} parent=1 // pred_check
      _
    $region7: #{tpu_custom_call.1} parent=1 // pred_check_branch
      %29 = sbr.rel (0) target = $region9
    $region8: #{tpu_custom_call.1} parent=1 // pred_region
      %s31 = ssub.s32 256, 256
      %32 = vsyncadd [#allocation6], %s31
      %s33 = sshll.u32 [#allocation5], 4
      %s34 = int_to_ptr.vmem [resolvable:$true] %s33
      %39 = dma.hbm_to_vmem [thread:$0]  %s1, 256, %s34, [#allocation6], 64, 64, 4
    $region9: #{tpu_custom_call.1} parent=1 // pred_fallthru
      _
    // Predicated region
    $region10: #{tpu_custom_call.1} parent=1 // pred_check
      _
    $region11: #{tpu_custom_call.1} parent=1 // pred_check_branch
      %41 = sbr.rel (0) target = $region13
    $region12: #{tpu_custom_call.1} parent=1 // pred_region
      _
    $region13: #{tpu_custom_call.1} parent=1 // pred_fallthru
      _
    // Predicated region
    $region14: #{tpu_custom_call.1} parent=1 // pred_check
      _
    $region15: #{tpu_custom_call.1} parent=1 // pred_check_branch
      %43 = sbr.rel (0) target = $region17
    $region16: #{tpu_custom_call.1} parent=1 // pred_region
      %s45 = ssub.s32 1024, 1024
      %46 = vsyncadd [#allocation6], %s45
      %s47 = sshll.u32 [#allocation7], 4
      %s48 = int_to_ptr.vmem [resolvable:$true] %s47
      %53 = dma.hbm_to_vmem [thread:$0]  %s3, 1024, %s48, [#allocation6], 64, 64, 4
    $region17: #{tpu_custom_call.1} parent=1 // pred_fallthru
      _
    // Predicated region
    $region18: #{tpu_custom_call.1} parent=1 // pred_check
      _
    $region19: #{tpu_custom_call.1} parent=1 // pred_check_branch
      %55 = sbr.rel (0) target = $region21
    $region20: #{tpu_custom_call.1} parent=1 // pred_region
      _
    $region21: #{tpu_custom_call.1} parent=1 // pred_fallthru
      _
    // Predicated region
    $region22: #{tpu_custom_call.1} parent=1 // pred_check
      _
    $region23: #{tpu_custom_call.1} parent=1 // pred_check_branch
      %57 = sbr.rel (0) target = $region25
    $region24: #{tpu_custom_call.1} parent=1 // pred_region
      %s59 = ssub.s32 1024, 1024
      %60 = vsyncadd [#allocation9], %s59
      %s61 = sshll.u32 [#allocation8], 4
      %s62 = int_to_ptr.vmem [resolvable:$true] %s61
      %67 = dma.hbm_to_vmem [thread:$0]  %s5, 1024, %s62, [#allocation9], 64, 64, 4
    $region25: #{tpu_custom_call.1} parent=1 // pred_fallthru
      _
    // Predicated region
    $region26: #{tpu_custom_call.1} parent=1 // pred_check
      _
    $region27: #{tpu_custom_call.1} parent=1 // pred_check_branch
      %69 = sbr.rel (0) target = $region29
    $region28: #{tpu_custom_call.1} parent=1 // pred_region
      _
    $region29: #{tpu_custom_call.1} parent=1 // pred_fallthru
      _
    // Predicated region
    $region30: #{tpu_custom_call.1} parent=1 // pred_check
      _
    $region31: #{tpu_custom_call.1} parent=1 // pred_check_branch
      %71 = sbr.rel (0) target = $region33
    $region32: #{tpu_custom_call.1} parent=1 // pred_region
      %72 = dma.done [#allocation3], 256
    $region33: #{tpu_custom_call.1} parent=1 // pred_fallthru
      _
    // Predicated region
    $region34: #{tpu_custom_call.1} parent=1 // pred_check
      _
    $region35: #{tpu_custom_call.1} parent=1 // pred_check_branch
      %74 = sbr.rel (0) target = $region37
    $region36: #{tpu_custom_call.1} parent=1 // pred_region
      %75 = dma.done [#allocation6], 256
    $region37: #{tpu_custom_call.1} parent=1 // pred_fallthru
      _
    // Predicated region
    $region38: #{tpu_custom_call.1} parent=1 // pred_check
      _
    $region39: #{tpu_custom_call.1} parent=1 // pred_check_branch
      %77 = sbr.rel (0) target = $region41
    $region40: #{tpu_custom_call.1} parent=1 // pred_region
      %78 = dma.done [#allocation6], 1024
    $region41: #{tpu_custom_call.1} parent=1 // pred_fallthru
      _
    // Predicated region
    $region42: #{tpu_custom_call.1} parent=1 // pred_check
      _
    $region43: #{tpu_custom_call.1} parent=1 // pred_check_branch
      %80 = sbr.rel (0) target = $region45
    $region44: #{tpu_custom_call.1} parent=1 // pred_region
      %81 = dma.done [#allocation9], 1024
    $region45: #{tpu_custom_call.1} parent=1 // pred_fallthru
      _
    %v83 = vld [vmem:[#allocation2] sm:$0xff]
    %v84 = vld [vmem:[#allocation2 + $0x8] sm:$0xff]
    %v85 = vpack.c.bf16 %v84, %v83
    %v86 = vld [vmem:[#allocation5] sm:$0xf]
    %v87 = vld [vmem:[#allocation5 + $0x4] sm:$0xf]
    %v88 = vld [vmem:[#allocation5 + $0x8] sm:$0xf]
    %v89 = vld [vmem:[#allocation5 + $0xc] sm:$0xf]
    %v90 = vld [vmem:[%s2] sm:$0x1]
    %v92 = vlaneseq
    %v93 = vshrl.u32 %v92, 7
    %v94 = vsub.s32 0, %v93
    %v95 = vrot.slane %v90, %v94
    %v101 = vunpack.c.l.b16 %v86
    %v102 = vunpack.c.l.b16 %v87
    %v103 = vunpack.c.l.b16 %v88
    %v104 = vunpack.c.l.b16 %v89
    %v105 = vpack.c.b16 %v102, %v101
    %v106 = vpack.c.b16 %v104, %v103
    %vm109 = vcmask 261120
    %v111 = vsel %vm109, %v85, 0
    %113 = vmatprep.subr.bf16.mxu0 0
    %114 = vmatpush1.bf16.msra.mxu0 0
    %115 = vmatprep.subr.bf16.mxu0 0
    %116 = vmatpush1.bf16.msra.mxu0 0
    %117 = vmatprep.subr.bf16.mxu0 0
    %118 = vmatpush1.bf16.msra.mxu0 0
    %119 = vmatprep.subr.bf16.mxu0 0
    %120 = vmatpush1.bf16.msra.mxu0 0
    %121 = vmatprep.subr.bf16.mxu0 0
    %122 = vmatpush1.bf16.msra.mxu0 0
    %123 = vmatprep.subr.bf16.mxu0 0
    %124 = vmatpush1.bf16.msra.mxu0 0
    %125 = vmatprep.subr.bf16.mxu0 0
    %126 = vmatpush1.bf16.msra.mxu0 %v106
    %127 = vmatprep.subr.bf16.mxu0 0
    %128 = vmatpush1.bf16.msra.mxu0 %v105
    %129 = vmatprep.subr.bf16.mxu0 0
    %130 = vmatpush2.bf16.msra.mxu0 0
    %131 = vmatprep.subr.bf16.mxu0 0
    %132 = vmatpush2.bf16.msra.mxu0 0
    %133 = vmatprep.subr.bf16.mxu0 0
    %134 = vmatpush2.bf16.msra.mxu0 0
    %135 = vmatprep.subr.bf16.mxu0 0
    %136 = vmatpush2.bf16.msra.mxu0 0
    %137 = vmatprep.subr.bf16.mxu0 0
    %138 = vmatpush2.bf16.msra.mxu0 0
    %139 = vmatprep.subr.bf16.mxu0 0
    %140 = vmatpush2.bf16.msra.mxu0 0
    %141 = vmatprep.subr.bf16.mxu0 0
    %142 = vmatpush2.bf16.msra.mxu0 0
    %143 = vmatprep.subr.bf16.mxu0 0
    %144 = vmatpush2.bf16.msra.mxu0 0
    %145 = vmatprep.mubr.bf16.mxu0 0
    %146 = vmatmul.mubr.bf16.gmra.mxu0 %v111
    %v147 = vpop.f32.mrf.mxu0
    %v148 = vadd.f32 %v95, %v147
    %v149 = vpop.f32.mrf.mxu0
    %v150 = vpop.f32.mrf.mxu0
    %v151 = vadd.f32 %v95, %v150
    %v152 = vpop.f32.mrf.mxu0
    %153 = vdwg.mxu0
    %v154 = vmul.f32 %v148, 0.5
    %v155 = vmul.f32 %v151, 0.5
    %v156 = vmul.f32 %v148, 0.70710677
    %v157 = vmul.f32 %v151, 0.70710677
    %v158 = verf.f32.pop %v156
    %v159 = verf.f32.pop %v157
    %v160 = vadd.f32 %v158, 1.0
    %v161 = vadd.f32 %v159, 1.0
    %v162 = vmul.f32 %v154, %v160
    %v163 = vmul.f32 %v155, %v161
    %v164 = vpack.c.bf16 %v163, %v162
    %v165 = vld [vmem:[#allocation7] sm:$0xf]
    %v166 = vld [vmem:[#allocation7 + $0x4] sm:$0xf]
    %v167 = vld [vmem:[#allocation7 + $0x8] sm:$0xf]
    %v168 = vld [vmem:[#allocation7 + $0xc] sm:$0xf]
    %v169 = vld [vmem:[#allocation7 + $0x10] sm:$0xf]
    %v170 = vld [vmem:[#allocation7 + $0x14] sm:$0xf]
    %v171 = vld [vmem:[#allocation7 + $0x18] sm:$0xf]
    %v172 = vld [vmem:[#allocation7 + $0x1c] sm:$0xf]
    %v173 = vld [vmem:[#allocation7 + $0x20] sm:$0xf]
    %v174 = vld [vmem:[#allocation7 + $0x24] sm:$0xf]
    %v175 = vld [vmem:[#allocation7 + $0x28] sm:$0xf]
    %v176 = vld [vmem:[#allocation7 + $0x2c] sm:$0xf]
    %v177 = vld [vmem:[#allocation7 + $0x30] sm:$0xf]
    %v178 = vld [vmem:[#allocation7 + $0x34] sm:$0xf]
    %v179 = vld [vmem:[#allocation7 + $0x38] sm:$0xf]
    %v180 = vld [vmem:[#allocation7 + $0x3c] sm:$0xf]
    %v181 = vld [vmem:[%s4] sm:$0x1]
    %v183 = vlaneseq
    %v184 = vshrl.u32 %v183, 7
    %v185 = vsub.s32 0, %v184
    %v186 = vrot.slane %v181, %v185
    %v204 = vunpack.c.l.b16 %v165
    %v205 = vunpack.c.l.b16 %v166
    %v206 = vunpack.c.l.b16 %v167
    %v207 = vunpack.c.l.b16 %v168
    %v208 = vunpack.c.l.b16 %v169
    %v209 = vunpack.c.l.b16 %v170
    %v210 = vunpack.c.l.b16 %v171
    %v211 = vunpack.c.l.b16 %v172
    %v212 = vunpack.c.l.b16 %v173
    %v213 = vunpack.c.l.b16 %v174
    %v214 = vunpack.c.l.b16 %v175
    %v215 = vunpack.c.l.b16 %v176
    %v216 = vunpack.c.l.b16 %v177
    %v217 = vunpack.c.l.b16 %v178
    %v218 = vunpack.c.l.b16 %v179
    %v219 = vunpack.c.l.b16 %v180
    %v220 = vpack.c.b16 %v205, %v204
    %v221 = vpack.c.b16 %v207, %v206
    %v222 = vpack.c.b16 %v209, %v208
    %v223 = vpack.c.b16 %v211, %v210
    %v224 = vpack.c.b16 %v213, %v212
    %v225 = vpack.c.b16 %v215, %v214
    %v226 = vpack.c.b16 %v217, %v216
    %v227 = vpack.c.b16 %v219, %v218
    %236 = vmatprep.subr.bf16.mxu0 0
    %237 = vmatpush1.bf16.msra.mxu0 %v227
    %238 = vmatprep.subr.bf16.mxu0 0
    %239 = vmatpush1.bf16.msra.mxu0 %v226
    %240 = vmatprep.subr.bf16.mxu0 0
    %241 = vmatpush1.bf16.msra.mxu0 %v225
    %242 = vmatprep.subr.bf16.mxu0 0
    %243 = vmatpush1.bf16.msra.mxu0 %v224
    %244 = vmatprep.subr.bf16.mxu0 0
    %245 = vmatpush1.bf16.msra.mxu0 %v223
    %246 = vmatprep.subr.bf16.mxu0 0
    %247 = vmatpush1.bf16.msra.mxu0 %v222
    %248 = vmatprep.subr.bf16.mxu0 0
    %249 = vmatpush1.bf16.msra.mxu0 %v221
    %250 = vmatprep.subr.bf16.mxu0 0
    %251 = vmatpush1.bf16.msra.mxu0 %v220
    %252 = vmatprep.subr.bf16.mxu0 0
    %253 = vmatpush2.bf16.msra.mxu0 0
    %254 = vmatprep.subr.bf16.mxu0 0
    %255 = vmatpush2.bf16.msra.mxu0 0
    %256 = vmatprep.subr.bf16.mxu0 0
    %257 = vmatpush2.bf16.msra.mxu0 0
    %258 = vmatprep.subr.bf16.mxu0 0
    %259 = vmatpush2.bf16.msra.mxu0 0
    %260 = vmatprep.subr.bf16.mxu0 0
    %261 = vmatpush2.bf16.msra.mxu0 0
    %262 = vmatprep.subr.bf16.mxu0 0
    %263 = vmatpush2.bf16.msra.mxu0 0
    %264 = vmatprep.subr.bf16.mxu0 0
    %265 = vmatpush2.bf16.msra.mxu0 0
    %266 = vmatprep.subr.bf16.mxu0 0
    %267 = vmatpush2.bf16.msra.mxu0 0
    %268 = vmatprep.mubr.bf16.mxu0 0
    %269 = vmatmul.mubr.bf16.gmra.mxu0 %v164
    %v270 = vpop.f32.mrf.mxu0
    %v271 = vadd.f32 %v186, %v270
    %v272 = vpop.f32.mrf.mxu0
    %v273 = vpop.f32.mrf.mxu0
    %v274 = vadd.f32 %v186, %v273
    %v275 = vpop.f32.mrf.mxu0
    %276 = vdwg.mxu0
    %v277 = vmul.f32 %v271, 0.5
    %v278 = vmul.f32 %v274, 0.5
    %v279 = vmul.f32 %v271, 0.70710677
    %v280 = vmul.f32 %v274, 0.70710677
    %v281 = verf.f32.pop %v279
    %v282 = verf.f32.pop %v280
    %v283 = vadd.f32 %v281, 1.0
    %v284 = vadd.f32 %v282, 1.0
    %v285 = vmul.f32 %v277, %v283
    %v286 = vmul.f32 %v278, %v284
    %v287 = vpack.c.bf16 %v286, %v285
    %v288 = vld [vmem:[#allocation8] sm:$0xf]
    %v289 = vld [vmem:[#allocation8 + $0x4] sm:$0xf]
    %v290 = vld [vmem:[#allocation8 + $0x8] sm:$0xf]
    %v291 = vld [vmem:[#allocation8 + $0xc] sm:$0xf]
    %v292 = vld [vmem:[#allocation8 + $0x10] sm:$0xf]
    %v293 = vld [vmem:[#allocation8 + $0x14] sm:$0xf]
    %v294 = vld [vmem:[#allocation8 + $0x18] sm:$0xf]
    %v295 = vld [vmem:[#allocation8 + $0x1c] sm:$0xf]
    %v296 = vld [vmem:[#allocation8 + $0x20] sm:$0xf]
    %v297 = vld [vmem:[#allocation8 + $0x24] sm:$0xf]
    %v298 = vld [vmem:[#allocation8 + $0x28] sm:$0xf]
    %v299 = vld [vmem:[#allocation8 + $0x2c] sm:$0xf]
    %v300 = vld [vmem:[#allocation8 + $0x30] sm:$0xf]
    %v301 = vld [vmem:[#allocation8 + $0x34] sm:$0xf]
    %v302 = vld [vmem:[#allocation8 + $0x38] sm:$0xf]
    %v303 = vld [vmem:[#allocation8 + $0x3c] sm:$0xf]
    %v304 = vld [vmem:[%s6] sm:$0x1]
    %v306 = vlaneseq
    %v307 = vshrl.u32 %v306, 7
    %v308 = vsub.s32 0, %v307
    %v309 = vrot.slane %v304, %v308
    %v327 = vunpack.c.l.b16 %v288
    %v328 = vunpack.c.l.b16 %v289
    %v329 = vunpack.c.l.b16 %v290
    %v330 = vunpack.c.l.b16 %v291
    %v331 = vunpack.c.l.b16 %v292
    %v332 = vunpack.c.l.b16 %v293
    %v333 = vunpack.c.l.b16 %v294
    %v334 = vunpack.c.l.b16 %v295
    %v335 = vunpack.c.l.b16 %v296
    %v336 = vunpack.c.l.b16 %v297
    %v337 = vunpack.c.l.b16 %v298
    %v338 = vunpack.c.l.b16 %v299
    %v339 = vunpack.c.l.b16 %v300
    %v340 = vunpack.c.l.b16 %v301
    %v341 = vunpack.c.l.b16 %v302
    %v342 = vunpack.c.l.b16 %v303
    %v343 = vpack.c.b16 %v328, %v327
    %v344 = vpack.c.b16 %v330, %v329
    %v345 = vpack.c.b16 %v332, %v331
    %v346 = vpack.c.b16 %v334, %v333
    %v347 = vpack.c.b16 %v336, %v335
    %v348 = vpack.c.b16 %v338, %v337
    %v349 = vpack.c.b16 %v340, %v339
    %v350 = vpack.c.b16 %v342, %v341
    %359 = vmatprep.subr.bf16.mxu0 0
    %360 = vmatpush1.bf16.msra.mxu0 %v350
    %361 = vmatprep.subr.bf16.mxu0 0
    %362 = vmatpush1.bf16.msra.mxu0 %v349
    %363 = vmatprep.subr.bf16.mxu0 0
    %364 = vmatpush1.bf16.msra.mxu0 %v348
    %365 = vmatprep.subr.bf16.mxu0 0
    %366 = vmatpush1.bf16.msra.mxu0 %v347
    %367 = vmatprep.subr.bf16.mxu0 0
    %368 = vmatpush1.bf16.msra.mxu0 %v346
    %369 = vmatprep.subr.bf16.mxu0 0
    %370 = vmatpush1.bf16.msra.mxu0 %v345
    %371 = vmatprep.subr.bf16.mxu0 0
    %372 = vmatpush1.bf16.msra.mxu0 %v344
    %373 = vmatprep.subr.bf16.mxu0 0
    %374 = vmatpush1.bf16.msra.mxu0 %v343
    %375 = vmatprep.subr.bf16.mxu0 0
    %376 = vmatpush2.bf16.msra.mxu0 0
    %377 = vmatprep.subr.bf16.mxu0 0
    %378 = vmatpush2.bf16.msra.mxu0 0
    %379 = vmatprep.subr.bf16.mxu0 0
    %380 = vmatpush2.bf16.msra.mxu0 0
    %381 = vmatprep.subr.bf16.mxu0 0
    %382 = vmatpush2.bf16.msra.mxu0 0
    %383 = vmatprep.subr.bf16.mxu0 0
    %384 = vmatpush2.bf16.msra.mxu0 0
    %385 = vmatprep.subr.bf16.mxu0 0
    %386 = vmatpush2.bf16.msra.mxu0 0
    %387 = vmatprep.subr.bf16.mxu0 0
    %388 = vmatpush2.bf16.msra.mxu0 0
    %389 = vmatprep.subr.bf16.mxu0 0
    %390 = vmatpush2.bf16.msra.mxu0 0
    %391 = vmatprep.mubr.bf16.mxu0 0
    %392 = vmatmul.mubr.bf16.gmra.mxu0 %v287
    %v393 = vpop.f32.mrf.mxu0
    %v394 = vadd.f32 %v309, %v393
    %v395 = vpop.f32.mrf.mxu0
    %v396 = vpop.f32.mrf.mxu0
    %v397 = vadd.f32 %v309, %v396
    %v398 = vpop.f32.mrf.mxu0
    %399 = vdwg.mxu0
    %400 = vmax.xlane.f32.xlu0 %v394
    %v401 = vpop.xlane.xlu0 %400
    %402 = vmax.xlane.f32.xlu0 %v397
    %v403 = vpop.xlane.xlu0 %402
    %v404 = vsub.f32 %v394, %v401
    %v405 = vsub.f32 %v397, %v403
    %v406 = vmul.f32 %v404, 1.442695
    %v407 = vpow.pop %v406
    %v408 = vmul.f32 %v405, 1.442695
    %v409 = vpow.pop %v408
    %410 = vadd.xlane.f32.xlu0 %v407
    %v411 = vpop.xlane.xlu0 %410
    %412 = vadd.xlane.f32.xlu0 %v409
    %v413 = vpop.xlane.xlu0 %412
    %v414 = vrcp.pop %v411
    %v415 = vrcp.pop %v413
    %v416 = vmul.f32 %v407, %v414
    %v417 = vmul.f32 %v409, %v415
    %418 = vst [vmem:[#allocation10] sm:$0xff] %v416
    %419 = vst [vmem:[#allocation10 + $0x8] sm:$0xff] %v417
    // Predicated region
    $region46: #{tpu_custom_call.1} parent=1 // pred_check
      _
    $region47: #{tpu_custom_call.1} parent=1 // pred_check_branch
      %421 = sbr.rel (0) target = $region49
    $region48: #{tpu_custom_call.1} parent=1 // pred_region
      %s423 = ssub.s32 256, 256
      %424 = vsyncadd [#allocation4], %s423
      %s425 = sshll.u32 [#allocation10], 4
      %s426 = int_to_ptr.vmem [resolvable:$true] %s425
      %431 = dma.vmem_to_hbm [thread:$0]  %s426, 256, %s7, [#allocation4], 128, 128, 8
    $region49: #{tpu_custom_call.1} parent=1 // pred_fallthru
      _
    // Predicated region
    $region50: #{tpu_custom_call.1} parent=1 // pred_check
      _
    $region51: #{tpu_custom_call.1} parent=1 // pred_check_branch
      %433 = sbr.rel (0) target = $region53
    $region52: #{tpu_custom_call.1} parent=1 // pred_region
      %434 = dma.done [#allocation4], 256
    $region53: #{tpu_custom_call.1} parent=1 // pred_fallthru
      _
    %435 = vsyncpa [#allocation3], 1
    %436 = vsyncpa [#allocation6], 1
    %437 = vsyncpa [#allocation9], 1
    %438 = vsyncpa [#allocation4], 1

</llo_original>
